<compile_context>
chip_gen: v7x
topology: tpu7x:2x2x1
jax: 0.10.0
libtpu: 0.0.40
codegen_flags: <defaults>
</compile_context>

<pallas_src>
import functools

import jax
import jax.numpy as jnp
from jax.experimental import pallas as pl
from jax.experimental.pallas import tpu as pltpu

CUBER_NUM = 5        # rooms per sample
STATE_COLS = 4       # [cx, cy, w, h]
GRID_W = 45.0        # grid_size[0]
GRID_H = 120.0       # grid_size[1]
LANE = 128           # TPU lane width; batch tiles are multiples of this
DEFAULT_BLOCK_B = 512


def _round_up(n, m):
    return ((n + m - 1) // m) * m


def _rl_reward_loss_kernel(state_ref, out_ref, *, grid_w, grid_h):
    """state_ref: (4, 5, Bt) component-major, batch on lanes. out_ref: (1, Bt)."""
    s = state_ref[...].astype(jnp.float32)        # in-kernel cast (VALU slack is huge)
    cx, cy, w, h = s[0], s[1], s[2], s[3]         # each (5, Bt)

    # loss2: uncovered floor area, halved, clamped at zero (per lane/sample).
    area = jnp.sum(w * h, axis=0, keepdims=True)                  # (1, Bt)
    loss2 = jnp.maximum((grid_w * grid_h - area) * 0.5, 0.0)

    # loss3: extrema of the rounded room rectangles.  Clamping is one-sided,
    # exactly matching the reference `if` statements (start >= 0, end <= grid).
    x_start = jnp.maximum(jnp.round(cx - w * 0.5), 0.0)
    x_end = jnp.minimum(jnp.round(cx + w * 0.5), grid_w)
    y_start = jnp.maximum(jnp.round(cy - h * 0.5), 0.0)
    # y_end (max_height) is computed by the reference module but never used.
    loss3 = (jnp.min(y_start, axis=0, keepdims=True)
             + jnp.min(x_start, axis=0, keepdims=True)
             - jnp.max(x_end, axis=0, keepdims=True))             # (1, Bt)

    out_ref[...] = loss2 + loss3


def rl_reward_loss_batched(x, relation_target=None, *,
                           grid_size=(GRID_W, GRID_H), block_b=DEFAULT_BLOCK_B):
    """Batched rl_reward_loss: returns loss2 + loss3 per sample, shape (B,).

    x: (B, ...) with 20 elements per sample (interpreted as (B, 5, 4) states).
    relation_target: optional; size-checked only.  It feeds
        loss1 = get_reward(RELATION_TARGET), which depends on the external
        Score_relation / Discrete5_Move_DQN_Env classes that are not part of
        the provided module source, so loss1 is NOT included in the result.
    """
    b = x.shape[0]
    assert x.size == b * CUBER_NUM * STATE_COLS, x.shape
    if relation_target is not None:
        assert relation_target.size % (CUBER_NUM * 6) == 0, relation_target.shape

    # Component-major, batch-on-lanes layout: (4 components, 5 cubers, B).
    state = jnp.transpose(jnp.reshape(x, (b, CUBER_NUM, STATE_COLS)), (2, 1, 0))

    block_b = _round_up(block_b, LANE)
    bt = block_b if b > block_b else _round_up(b, LANE)
    b_pad = _round_up(b, bt)
    if b_pad != b:
        state = jnp.pad(state, ((0, 0), (0, 0), (0, b_pad - b)))

    kernel = functools.partial(
        _rl_reward_loss_kernel,
        grid_w=float(grid_size[0]),
        grid_h=float(grid_size[1]),
    )
    out = pl.pallas_call(
        kernel,
        out_shape=jax.ShapeDtypeStruct((1, b_pad), jnp.float32),
        grid=(b_pad // bt,),
        in_specs=[pl.BlockSpec((STATE_COLS, CUBER_NUM, bt), lambda i: (0, 0, i))],
        out_specs=pl.BlockSpec((1, bt), lambda i: (0, i)),
        compiler_params=pltpu.CompilerParams(dimension_semantics=("parallel",)),
    )(state)
    return out[0, :b]


def rl_reward_loss(x, relation_target, *, grid_size=(GRID_W, GRID_H)):
    """Module-signature path: scalar (loss2 + loss3) for one 20-element state.

    NOTE: loss1 = get_reward(RELATION_TARGET) is omitted (its external
    Score_relation / Discrete5_Move_DQN_Env dependencies are unavailable), so
    callers receive loss2 + loss3 only.
    """
    assert x.size == CUBER_NUM * STATE_COLS, x.shape
    out = rl_reward_loss_batched(
        jnp.reshape(x, (1, CUBER_NUM, STATE_COLS)), relation_target,
        grid_size=grid_size)
    return out[0]


def _rl_reward_loss_ref(x, grid_size=(GRID_W, GRID_H)):
    """Pure-JAX reference of the translatable part (loss2 + loss3), batched."""
    s = jnp.reshape(x, (-1, CUBER_NUM, STATE_COLS)).astype(jnp.float32)
    gw, gh = float(grid_size[0]), float(grid_size[1])
    cx, cy, w, h = s[..., 0], s[..., 1], s[..., 2], s[..., 3]   # each (B, 5)
    area = jnp.sum(w * h, axis=-1)
    loss2 = jnp.maximum((gw * gh - area) * 0.5, 0.0)
    x_start = jnp.maximum(jnp.round(cx - w / 2), 0.0)
    x_end = jnp.minimum(jnp.round(cx + w / 2), gw)
    y_start = jnp.maximum(jnp.round(cy - h / 2), 0.0)
    loss3 = (jnp.min(y_start, axis=-1) + jnp.min(x_start, axis=-1)
             - jnp.max(x_end, axis=-1))
    return loss2 + loss3


if __name__ == "__main__":
    key = jax.random.PRNGKey(0)
    kx, kr, kb = jax.random.split(key, 3)

    # --- single-shot path (module signature parity) ---------------------------
    # Range includes negative / out-of-grid values so the one-sided clamps and
    # the min/max padding-identity behavior are exercised.
    x = jax.random.uniform(kx, (CUBER_NUM * STATE_COLS,), dtype=jnp.float32,
                           minval=-5.0, maxval=50.0)
    relation_target = jax.random.randint(kr, (CUBER_NUM * 6,), minval=-1,
                                         maxval=3, dtype=jnp.int32)
    out = rl_reward_loss(x, relation_target)
    jax.block_until_ready(out)
    ref = _rl_reward_loss_ref(x)[0]
    assert jnp.allclose(out, ref, rtol=1e-5, atol=1e-5), (out, ref)

    # --- batched path (amortizes per-call overhead; lane-dense output) --------
    B = 300   # deliberately not a multiple of 128 to exercise lane padding
    xb = jax.random.uniform(kb, (B, CUBER_NUM, STATE_COLS), dtype=jnp.float32,
                            minval=-10.0, maxval=60.0)
    outb = rl_reward_loss_batched(xb, block_b=256)   # 2 grid steps, "parallel"
    jax.block_until_ready(outb)
    refb = _rl_reward_loss_ref(xb)
    assert outb.shape == (B,), outb.shape
    assert jnp.allclose(outb, refb, rtol=1e-5, atol=1e-5), (outb[:4], refb[:4])

    print("KERNEL_OK")
</pallas_src>

<mosaic_0001>
module attributes {stable_mosaic.version = 11 : i64} {
  func.func @_rl_reward_loss_kernel(%arg0: i32, %arg1: memref<4x5x128xf32, #tpu.memory_space<vmem>>, %arg2: memref<1x128xf32, #tpu.memory_space<vmem>>) attributes {dimension_semantics = [#tpu.dimension_semantics<parallel>], iteration_bounds = array<i64: 1>, scalar_prefetch = 0 : i64, scratch_operands = 0 : i64, tpu.core_type = #tpu.core_type<tc>, window_params = [{transform_indices = @transform_0, window_bounds = array<i64: 4, 5, 128>}, {transform_indices = @transform_1, window_bounds = array<i64: 1, 128>}]} {
    %c0 = arith.constant 0 : index
    %c0_0 = arith.constant 0 : index
    %c0_1 = arith.constant 0 : index
    %0 = vector.load %arg1[%c0, %c0_0, %c0_1] : memref<4x5x128xf32, #tpu.memory_space<vmem>>, vector<4x5x128xf32>
    %1 = vector.extract_strided_slice %0 {offsets = [0, 0, 0], sizes = [1, 5, 128], strides = [1, 1, 1]} : vector<4x5x128xf32> to vector<1x5x128xf32>
    %2 = vector.shape_cast %1 : vector<1x5x128xf32> to vector<5x128xf32>
    %3 = vector.extract_strided_slice %0 {offsets = [1, 0, 0], sizes = [1, 5, 128], strides = [1, 1, 1]} : vector<4x5x128xf32> to vector<1x5x128xf32>
    %4 = vector.shape_cast %3 : vector<1x5x128xf32> to vector<5x128xf32>
    %5 = vector.extract_strided_slice %0 {offsets = [2, 0, 0], sizes = [1, 5, 128], strides = [1, 1, 1]} : vector<4x5x128xf32> to vector<1x5x128xf32>
    %6 = vector.shape_cast %5 : vector<1x5x128xf32> to vector<5x128xf32>
    %7 = vector.extract_strided_slice %0 {offsets = [3, 0, 0], sizes = [1, 5, 128], strides = [1, 1, 1]} : vector<4x5x128xf32> to vector<1x5x128xf32>
    %8 = vector.shape_cast %7 : vector<1x5x128xf32> to vector<5x128xf32>
    %9 = arith.mulf %6, %8 : vector<5x128xf32>
    %cst = arith.constant dense<0.000000e+00> : vector<128xf32>
    %10 = vector.multi_reduction <add>, %9, %cst [0] : vector<5x128xf32> to vector<128xf32>
    %11 = vector.shape_cast %10 : vector<128xf32> to vector<1x128xf32>
    %cst_2 = arith.constant 5.400000e+03 : f32
    %12 = vector.broadcast %cst_2 : f32 to vector<1x128xf32>
    %13 = arith.subf %12, %11 : vector<1x128xf32>
    %cst_3 = arith.constant 5.000000e-01 : f32
    %14 = vector.broadcast %cst_3 : f32 to vector<1x128xf32>
    %15 = arith.mulf %13, %14 : vector<1x128xf32>
    %cst_4 = arith.constant 0.000000e+00 : f32
    %16 = vector.broadcast %cst_4 : f32 to vector<1x128xf32>
    %17 = arith.maximumf %15, %16 : vector<1x128xf32>
    %cst_5 = arith.constant 5.000000e-01 : f32
    %18 = vector.broadcast %cst_5 : f32 to vector<5x128xf32>
    %19 = arith.mulf %6, %18 : vector<5x128xf32>
    %20 = arith.subf %2, %19 : vector<5x128xf32>
    %21 = math.roundeven %20 : vector<5x128xf32>
    %cst_6 = arith.constant 0.000000e+00 : f32
    %22 = vector.broadcast %cst_6 : f32 to vector<5x128xf32>
    %23 = arith.maximumf %21, %22 : vector<5x128xf32>
    %cst_7 = arith.constant 5.000000e-01 : f32
    %24 = vector.broadcast %cst_7 : f32 to vector<5x128xf32>
    %25 = arith.mulf %6, %24 : vector<5x128xf32>
    %26 = arith.addf %2, %25 : vector<5x128xf32>
    %27 = math.roundeven %26 : vector<5x128xf32>
    %cst_8 = arith.constant 4.500000e+01 : f32
    %28 = vector.broadcast %cst_8 : f32 to vector<5x128xf32>
    %29 = arith.minimumf %27, %28 : vector<5x128xf32>
    %cst_9 = arith.constant 5.000000e-01 : f32
    %30 = vector.broadcast %cst_9 : f32 to vector<5x128xf32>
    %31 = arith.mulf %8, %30 : vector<5x128xf32>
    %32 = arith.subf %4, %31 : vector<5x128xf32>
    %33 = math.roundeven %32 : vector<5x128xf32>
    %cst_10 = arith.constant 0.000000e+00 : f32
    %34 = vector.broadcast %cst_10 : f32 to vector<5x128xf32>
    %35 = arith.maximumf %33, %34 : vector<5x128xf32>
    %cst_11 = arith.constant dense<0x7F800000> : vector<128xf32>
    %36 = vector.multi_reduction <minimumf>, %35, %cst_11 [0] : vector<5x128xf32> to vector<128xf32>
    %37 = vector.shape_cast %36 : vector<128xf32> to vector<1x128xf32>
    %cst_12 = arith.constant dense<0x7F800000> : vector<128xf32>
    %38 = vector.multi_reduction <minimumf>, %23, %cst_12 [0] : vector<5x128xf32> to vector<128xf32>
    %39 = vector.shape_cast %38 : vector<128xf32> to vector<1x128xf32>
    %40 = arith.addf %37, %39 : vector<1x128xf32>
    %cst_13 = arith.constant dense<0xFF800000> : vector<128xf32>
    %41 = vector.multi_reduction <maximumf>, %29, %cst_13 [0] : vector<5x128xf32> to vector<128xf32>
    %42 = vector.shape_cast %41 : vector<128xf32> to vector<1x128xf32>
    %43 = arith.subf %40, %42 : vector<1x128xf32>
    %44 = arith.addf %17, %43 : vector<1x128xf32>
    %c0_14 = arith.constant 0 : index
    %c0_15 = arith.constant 0 : index
    %45 = vector.load %arg2[%c0_14, %c0_15] : memref<1x128xf32, #tpu.memory_space<vmem>>, vector<1x128xf32>
    tpu.vector_store %arg2[%c0_14, %c0_15], %44 {strides = array<i32>} : memref<1x128xf32, #tpu.memory_space<vmem>>, vector<1x128xf32>,
    return
  }
  func.func @transform_0(%arg0: i32) -> (i32, i32, i32) {
    %c0_i32 = arith.constant 0 : i32
    %c0_i32_0 = arith.constant 0 : i32
    %c0_i32_1 = arith.constant 0 : i32
    return %c0_i32, %c0_i32_0, %arg0 : i32, i32, i32
  }
  func.func @transform_1(%arg0: i32) -> (i32, i32) {
    %c0_i32 = arith.constant 0 : i32
    %c0_i32_0 = arith.constant 0 : i32
    return %c0_i32, %arg0 : i32, i32
  }
}

</mosaic_0001>

<llo_original>
// kernel: tpu_custom_call.1
$region0: #{tpu_custom_call.1}
  #allocation0 [shape = 'u32[]', space=smem, size = 0x4, offset = 0x4, fixed_abs, tag = 'smem constant byte address 0x4 - core index']
  #allocation1 [shape = 'u32[144,128]{1,0:T(1,128)}', space=vmem, size = 0x12000, scoped, tag = 'internal scratch']
  %s0 = inlined_call_operand.vmem [shape: f32[4,5,128], index: 0, kind: input, shape index: {}]
  %s1 = inlined_call_operand.hbm [shape: f32[1,128], index: 1, kind: output, shape index: {}]
  %s2 = sld [smem:[#allocation0]]
  $region14: #{tpu_custom_call.1} parent=0
    _
  %s4 = ssub.s32 1, %s2
  %s5 = scalar_select 0, %s4, %s2
  $region1: #{tpu_custom_call.1} parent=0
    #allocation2 [shape = 'u8[512]{0}', space=vmem, size = 0x400, scoped, tag = 'output window, operand 0, single buffered']
    #allocation3 [shape = 's32[1]{0}', space=sflag, size = 0x4, scoped, tag = 'scoped memory for tpu_custom_call.1']
    %6 = vsyncpa [#allocation3], 0
    // Predicated region
    $region2: #{tpu_custom_call.1} parent=1 // pred_check
      _
    $region3: #{tpu_custom_call.1} parent=1 // pred_check_branch
      %8 = sbr.rel (0) target = $region5
    $region4: #{tpu_custom_call.1} parent=1 // pred_region
      _
    $region5: #{tpu_custom_call.1} parent=1 // pred_fallthru
      _
    %v9 = vld [vmem:[%s0] sm:$0x1f]
    %v10 = vld [vmem:[%s0 + $0x8] sm:$0x1f]
    %v11 = vld [vmem:[%s0 + $0x10] sm:$0x1f]
    %v12 = vld [vmem:[%s0 + $0x18] sm:$0x1f]
    %v13 = vmul.f32 %v11, %v12
    %vm14 = vcmask 1044480
    %v15 = vsel %vm14, %v13, 0.0
    %v16 = vrot.slane %v15, 4
    %v17 = vadd.f32 %v15, %v16
    %v18 = vrot.slane %v17, 2
    %v19 = vadd.f32 %v17, %v18
    %v20 = vrot.slane %v19, 1
    %v21 = vadd.f32 %v19, %v20
    %v22 = vsub.f32 5400.0, %v21
    %v23 = vmul.f32 %v22, 0.5
    %v24 = vmax.f32 %v23, 0.0
    %v25 = vmul.f32 %v11, 0.5
    %v26 = vsub.f32 %v9, %v25
    %v27 = vround.ne.pseudo %v26
    %v28 = vmax.f32 %v27, 0.0
    %v29 = vadd.f32 %v9, %v25
    %v30 = vround.ne.pseudo %v29
    %v31 = vmin.f32 %v30, 45.0
    %v32 = vmul.f32 %v12, 0.5
    %v33 = vsub.f32 %v10, %v32
    %v34 = vround.ne.pseudo %v33
    %v35 = vmax.f32 %v34, 0.0
    %v36 = vsel %vm14, %v35, inf
    %v37 = vrot.slane %v36, 4
    %v38 = vmin.f32 %v36, %v37
    %v39 = vrot.slane %v38, 2
    %v40 = vmin.f32 %v38, %v39
    %v41 = vrot.slane %v40, 1
    %v42 = vmin.f32 %v40, %v41
    %v43 = vsel %vm14, %v28, inf
    %v44 = vrot.slane %v43, 4
    %v45 = vmin.f32 %v43, %v44
    %v46 = vrot.slane %v45, 2
    %v47 = vmin.f32 %v45, %v46
    %v48 = vrot.slane %v47, 1
    %v49 = vmin.f32 %v47, %v48
    %v50 = vadd.f32 %v42, %v49
    %v51 = vsel %vm14, %v31, -inf
    %v52 = vrot.slane %v51, 4
    %v53 = vmax.f32 %v51, %v52
    %v54 = vrot.slane %v53, 2
    %v55 = vmax.f32 %v53, %v54
    %v56 = vrot.slane %v55, 1
    %v57 = vmax.f32 %v55, %v56
    %v58 = vsub.f32 %v50, %v57
    %v59 = vadd.f32 %v24, %v58
    %60 = vst [vmem:[#allocation2] sm:$0x1] %v59
    // Predicated region
    $region6: #{tpu_custom_call.1} parent=1 // pred_check
      _
    $region7: #{tpu_custom_call.1} parent=1 // pred_check_branch
      %62 = sbr.rel (0) target = $region9
    $region8: #{tpu_custom_call.1} parent=1 // pred_region
      %s64 = ssub.s32 16, 16
      %65 = vsyncadd [#allocation3], %s64
      %s67 = sshll.u32 [#allocation2], 4
      %s68 = int_to_ptr.vmem [resolvable:$true] %s67
      %70 = dma.vmem_to_hbm [thread:$0]  %s68, 16, %s1, [#allocation3]
    $region9: #{tpu_custom_call.1} parent=1 // pred_fallthru
      _
    // Predicated region
    $region10: #{tpu_custom_call.1} parent=1 // pred_check
      _
    $region11: #{tpu_custom_call.1} parent=1 // pred_check_branch
      %72 = sbr.rel (0) target = $region13
    $region12: #{tpu_custom_call.1} parent=1 // pred_region
      %73 = dma.done [#allocation3], 16
    $region13: #{tpu_custom_call.1} parent=1 // pred_fallthru
      _
    %74 = vsyncpa [#allocation3], 1

</llo_original>
